<compile_context>
chip_gen: v5e
topology: v5e:2x2
jax: 0.10.0
libtpu: 0.0.40
codegen_flags: <defaults>
</compile_context>

<pallas_src>
import jax
import jax.numpy as jnp
from jax.experimental import pallas as pl
from jax.experimental.pallas import tpu as pltpu


def _lora_kernel(x_ref, a_ref, b_ref, o_ref, h_ref):
    # x_ref: (tm, in_features)  [caller dtype, cast here]
    # a_ref: (in_features, rank), b_ref: (rank, tn)   [compute dtype]
    # o_ref: (tm, tn)            h_ref: (tm, rank) f32 scratch (persists over j)
    @pl.when(pl.program_id(1) == 0)
    def _():
        # First projection only once per row tile; f32 accumulation on the MXU.
        xc = x_ref[...].astype(a_ref.dtype)
        h_ref[...] = jnp.dot(xc, a_ref[...], preferred_element_type=jnp.float32)

    # Second projection: feed the MXU in the compute dtype, accumulate in f32.
    y = jnp.dot(h_ref[...].astype(b_ref.dtype), b_ref[...],
                preferred_element_type=jnp.float32)
    o_ref[...] = y.astype(o_ref.dtype)


def _round_up(v, a):
    return (v + a - 1) // a * a


def _vmem_budget():
    """Generation-aware VMEM budget (tile selection) and scoped limit."""
    try:
        phys = int(pltpu.get_tpu_info().vmem_capacity_bytes)
    except Exception:
        phys = 64 * 1024 * 1024  # conservative (v7x per-TC VMEM)
    budget = int(0.45 * phys)          # tiles + double-buffering
    limit = int(0.60 * phys)           # leave headroom for Mosaic scratch
    return budget, limit


def lora_forward(x, a_weight, b_weight, *, scaling,
                 compute_dtype=jnp.bfloat16, out_dtype=None,
                 tm=1024, tn_max=1024):
    """x: (batch, seq, in_features) -> (batch, seq, out_features)."""
    if out_dtype is None:
        out_dtype = x.dtype
    batch, seq, in_features = x.shape
    rank, in_f2 = a_weight.shape
    out_features, rank2 = b_weight.shape
    assert in_f2 == in_features and rank2 == rank

    m = batch * seq
    x2 = x.reshape(m, in_features)  # no dtype cast here — cast happens in-kernel

    # --- wrapper-side weight prep (done once, not per grid step) -------------
    # Pre-transpose so the kernel does plain row-major matmuls, fold the LoRA
    # scaling into B in f32 before any downcast.
    a_t = a_weight.T.astype(compute_dtype)                                    # (in, rank)
    b_t = (b_weight.T * jnp.asarray(scaling, jnp.float32)).astype(compute_dtype)  # (rank, out)

    # --- N tiling (lane-dense, multiple of 128) -------------------------------
    if out_features <= tn_max:
        tn = out_features
    else:
        tn = 0
        for cand in range(tn_max, 0, -128):       # largest 128-multiple divisor
            if out_features % cand == 0:
                tn = cand
                break
        if tn == 0:
            tn = tn_max                            # ragged last N tile (masked)

    # --- row-tile selection under a generation-aware VMEM budget --------------
    budget, vmem_limit = _vmem_budget()
    bpe_x = jnp.dtype(x.dtype).itemsize
    bpe_c = jnp.dtype(compute_dtype).itemsize
    bpe_o = jnp.dtype(out_dtype).itemsize
    tm_eff = min(_round_up(tm, 16), _round_up(m, 16))

    def tile_bytes(tm_):
        dbuf = 2 * (tm_ * in_features * bpe_x      # x tile (double-buffered)
                    + in_features * rank * bpe_c   # A
                    + rank * tn * bpe_c            # B tile
                    + tm_ * tn * bpe_o)            # out tile
        scratch = tm_ * rank * 4                   # h accumulator (single-buffered)
        interm = tm_ * tn * 4 + tm_ * rank * bpe_c # f32 dot result + h cast copy
        return dbuf + scratch + interm

    while tm_eff > 16 and tile_bytes(tm_eff) > budget:
        tm_eff = max(16, _round_up(tm_eff // 2, 16))

    grid = (pl.cdiv(m, tm_eff), pl.cdiv(out_features, tn))

    out2 = pl.pallas_call(
        _lora_kernel,
        out_shape=jax.ShapeDtypeStruct((m, out_features), out_dtype),
        grid_spec=pltpu.PrefetchScalarGridSpec(
            num_scalar_prefetch=0,
            grid=grid,
            in_specs=[
                pl.BlockSpec((tm_eff, in_features), lambda i, j: (i, 0)),
                pl.BlockSpec((in_features, rank), lambda i, j: (0, 0)),
                pl.BlockSpec((rank, tn), lambda i, j: (0, j)),
            ],
            out_specs=pl.BlockSpec((tm_eff, tn), lambda i, j: (i, j)),
            scratch_shapes=[pltpu.VMEM((tm_eff, rank), jnp.float32)],
        ),
        compiler_params=pltpu.CompilerParams(
            # j reuses the cached h, so it must be sequential ("arbitrary");
            # i is independent and shards across v7x's 2 TensorCores.
            dimension_semantics=("parallel", "arbitrary"),
            vmem_limit_bytes=vmem_limit,
        ),
    )(x2, a_t, b_t)

    return out2.reshape(batch, seq, out_features)


def init_lora_params(key, in_features, out_features, rank):
    """Deterministic parameter init matching the PyTorch module's scheme."""
    # kaiming_uniform_(a=sqrt(5)) on (rank, in_features):
    #   gain = sqrt(2 / (1 + a^2)) = sqrt(1/3); bound = gain * sqrt(3 / fan_in)
    fan_in = in_features
    bound = (1.0 / 3.0) ** 0.5 * (3.0 / fan_in) ** 0.5
    a_weight = jax.random.uniform(
        key, (rank, in_features), minval=-bound, maxval=bound, dtype=jnp.float32
    )
    # nn.init.zeros_ on lora_B.weight
    b_weight = jnp.zeros((out_features, rank), dtype=jnp.float32)
    return a_weight, b_weight


if __name__ == "__main__":
    # --- small shapes consistent with a LoRA adapter on a linear layer -------
    batch, seq = 2, 8
    in_features, out_features = 32, 32
    rank, alpha = 16, 16
    scaling = alpha / rank

    key = jax.random.PRNGKey(0)
    kx, ka, kb, kx2, ka2, kb2 = jax.random.split(key, 6)

    x = jax.random.normal(kx, (batch, seq, in_features), dtype=jnp.float32)
    a_weight, b_weight = init_lora_params(ka, in_features, out_features, rank)
    # lora_B is zero-initialized in the module; also exercise a non-trivial B
    # so the numerical check covers real math, not just an all-zero output.
    b_rand = jax.random.normal(kb, (out_features, rank), dtype=jnp.float32) * 0.05

    def ref_fn(x_, a_, b_):
        # Pure-JAX reference (dropout in eval mode == identity).
        return (x_ @ a_.T) @ b_.T * scaling

    # f32 compute path — tight tolerance.
    out_f32 = jax.block_until_ready(
        lora_forward(x, a_weight, b_rand, scaling=scaling,
                     compute_dtype=jnp.float32))
    assert out_f32.shape == (batch, seq, out_features)
    assert jnp.allclose(out_f32, ref_fn(x, a_weight, b_rand),
                        atol=1e-5, rtol=1e-5)

    # bf16 compute path (default, MXU-friendly) — bf16 tolerance, f32 accum.
    out_bf16 = jax.block_until_ready(
        lora_forward(x, a_weight, b_rand, scaling=scaling))
    assert jnp.allclose(out_bf16, ref_fn(x, a_weight, b_rand),
                        atol=3e-2, rtol=3e-2)

    # bf16 output writeback (consumer-accumulate dtype) — same tolerance.
    out_bf16o = jax.block_until_ready(
        lora_forward(x, a_weight, b_rand, scaling=scaling,
                     out_dtype=jnp.bfloat16))
    assert out_bf16o.dtype == jnp.bfloat16
    assert jnp.allclose(out_bf16o.astype(jnp.float32),
                        ref_fn(x, a_weight, b_rand), atol=3e-2, rtol=3e-2)

    # Module-default init (zeroed lora_B): output must be exactly zero.
    out_zero = jax.block_until_ready(
        lora_forward(x, a_weight, b_weight, scaling=scaling))
    assert jnp.all(out_zero == 0.0)

    # Ragged-tile path: m and out_features NOT multiples of the tiles
    # (exercises pl.cdiv grid + masked partial blocks on both M and N).
    b2, s2, in2, out2, r2 = 2, 9, 48, 160, 8
    x_r = jax.random.normal(kx2, (b2, s2, in2), dtype=jnp.float32)
    a_r = jax.random.normal(ka2, (r2, in2), dtype=jnp.float32) * 0.1
    b_r = jax.random.normal(kb2, (out2, r2), dtype=jnp.float32) * 0.1
    out_r = jax.block_until_ready(
        lora_forward(x_r, a_r, b_r, scaling=scaling,
                     compute_dtype=jnp.float32, tn_max=128))
    ref_r = (x_r @ a_r.T) @ b_r.T * scaling
    assert out_r.shape == (b2, s2, out2)
    assert jnp.allclose(out_r, ref_r, atol=1e-5, rtol=1e-5)

    print("KERNEL_OK")
</pallas_src>

<mosaic_0001>
module attributes {stable_mosaic.version = 11 : i64} {
  func.func @_lora_kernel(%arg0: i32, %arg1: i32, %arg2: memref<16x32xf32, #tpu.memory_space<vmem>>, %arg3: memref<32x16xf32, #tpu.memory_space<vmem>>, %arg4: memref<16x32xf32, #tpu.memory_space<vmem>>, %arg5: memref<16x32xf32, #tpu.memory_space<vmem>>, %arg6: memref<16x16xf32, #tpu.memory_space<vmem>>) attributes {dimension_semantics = [#tpu.dimension_semantics<parallel>, #tpu.dimension_semantics<arbitrary>], iteration_bounds = array<i64: 1, 1>, scalar_prefetch = 0 : i64, scratch_operands = 1 : i64, tpu.core_type = #tpu.core_type<tc>, window_params = [{transform_indices = @transform_0, window_bounds = array<i64: 16, 32>}, {pipeline_mode = #tpu.pipeline_mode<synchronous>, transform_indices = @transform_1, window_bounds = array<i64: 32, 16>}, {transform_indices = @transform_2, window_bounds = array<i64: 16, 32>}, {transform_indices = @transform_3, window_bounds = array<i64: 16, 32>}]} {
    %c0_i32 = arith.constant 0 : i32
    %0 = arith.cmpi eq, %arg1, %c0_i32 : i32
    %1 = arith.extui %0 : i1 to i32
    %c0_i32_0 = arith.constant 0 : i32
    %2 = arith.cmpi ne, %1, %c0_i32_0 : i32
    scf.if %2 {
      %c0_6 = arith.constant 0 : index
      %c0_7 = arith.constant 0 : index
      %7 = vector.load %arg2[%c0_6, %c0_7] : memref<16x32xf32, #tpu.memory_space<vmem>>, vector<16x32xf32>
      %c0_8 = arith.constant 0 : index
      %c0_9 = arith.constant 0 : index
      %8 = vector.load %arg3[%c0_8, %c0_9] : memref<32x16xf32, #tpu.memory_space<vmem>>, vector<32x16xf32>
      %cst_10 = arith.constant dense<0.000000e+00> : vector<16x16xf32>
      %9 = tpu.matmul %7, %8, %cst_10 {dimension_numbers = #tpu.dot_dimension_numbers<[1], [0], [0], [1], [0, 0, 1, 1], [], []>} : vector<16x32xf32>, vector<32x16xf32>, vector<16x16xf32> -> vector<16x16xf32>
      %c0_11 = arith.constant 0 : index
      %c0_12 = arith.constant 0 : index
      %10 = vector.load %arg6[%c0_11, %c0_12] : memref<16x16xf32, #tpu.memory_space<vmem>>, vector<16x16xf32>
      tpu.vector_store %arg6[%c0_11, %c0_12], %9 {strides = array<i32>} : memref<16x16xf32, #tpu.memory_space<vmem>>, vector<16x16xf32>,
    } else {
    }
    %c0 = arith.constant 0 : index
    %c0_1 = arith.constant 0 : index
    %3 = vector.load %arg6[%c0, %c0_1] : memref<16x16xf32, #tpu.memory_space<vmem>>, vector<16x16xf32>
    %c0_2 = arith.constant 0 : index
    %c0_3 = arith.constant 0 : index
    %4 = vector.load %arg4[%c0_2, %c0_3] : memref<16x32xf32, #tpu.memory_space<vmem>>, vector<16x32xf32>
    %cst = arith.constant dense<0.000000e+00> : vector<16x32xf32>
    %5 = tpu.matmul %3, %4, %cst {dimension_numbers = #tpu.dot_dimension_numbers<[1], [0], [0], [1], [0, 0, 1, 1], [], []>} : vector<16x16xf32>, vector<16x32xf32>, vector<16x32xf32> -> vector<16x32xf32>
    %c0_4 = arith.constant 0 : index
    %c0_5 = arith.constant 0 : index
    %6 = vector.load %arg5[%c0_4, %c0_5] : memref<16x32xf32, #tpu.memory_space<vmem>>, vector<16x32xf32>
    tpu.vector_store %arg5[%c0_4, %c0_5], %5 {strides = array<i32>} : memref<16x32xf32, #tpu.memory_space<vmem>>, vector<16x32xf32>,
    return
  }
  func.func @transform_0(%arg0: i32, %arg1: i32) -> (i32, i32) {
    %c0_i32 = arith.constant 0 : i32
    %c0_i32_0 = arith.constant 0 : i32
    return %arg0, %c0_i32 : i32, i32
  }
  func.func @transform_1(%arg0: i32, %arg1: i32) -> (i32, i32) {
    %c0_i32 = arith.constant 0 : i32
    %c0_i32_0 = arith.constant 0 : i32
    %c0_i32_1 = arith.constant 0 : i32
    return %c0_i32, %c0_i32_0 : i32, i32
  }
  func.func @transform_2(%arg0: i32, %arg1: i32) -> (i32, i32) {
    %c0_i32 = arith.constant 0 : i32
    %c0_i32_0 = arith.constant 0 : i32
    return %c0_i32, %arg1 : i32, i32
  }
  func.func @transform_3(%arg0: i32, %arg1: i32) -> (i32, i32) {
    %c0_i32 = arith.constant 0 : i32
    return %arg0, %arg1 : i32, i32
  }
}

</mosaic_0001>

<llo_original>
// kernel: tpu_custom_call.1
$region0: #{tpu_custom_call.1}
  #allocation0 [shape = 'u32[]', space=smem, size = 0x4, offset = 0x4, fixed_abs, tag = 'smem constant byte address 0x4 - core index']
  #allocation1 [shape = 'u32[72,128]{1,0:T(1,128)}', space=vmem, size = 0x9000, scoped, tag = 'internal scratch']
  #allocation2 [shape = 'f32[16,16]{1,0:T(8,128)}', space=vmem, size = 0x2000, scoped, tag = 'scratch operand']
  %s0 = inlined_call_operand.vmem [shape: f32[16,32], index: 0, kind: input, shape index: {}]
  %s1 = inlined_call_operand.vmem [shape: f32[32,16], index: 1, kind: input, shape index: {}]
  %s2 = inlined_call_operand.vmem [shape: f32[16,32], index: 2, kind: input, shape index: {}]
  %s3 = inlined_call_operand.hbm [shape: f32[16,32], index: 3, kind: output, shape index: {}]
  %s4 = sld [smem:[#allocation0]]
  $region26: #{tpu_custom_call.1} parent=0
    _
  %s6 = ssub.s32 1, %s4
  %s7 = scalar_select 0, %s6, %s4
  $region1: #{tpu_custom_call.1} parent=0
    #allocation3 [shape = 'u8[8192]{0}', space=vmem, size = 0x2000, scoped, tag = 'output window, operand 0, single buffered']
    #allocation4 [shape = 's32[1]{0}', space=sflag, size = 0x4, scoped, tag = 'scoped memory for tpu_custom_call.1']
    %8 = vsyncpa [#allocation4], 0
    // Predicated region
    $region2: #{tpu_custom_call.1} parent=1 // pred_check
      _
    $region3: #{tpu_custom_call.1} parent=1 // pred_check_branch
      %10 = sbr.rel (0) target = $region5
    $region4: #{tpu_custom_call.1} parent=1 // pred_region
      _
    $region5: #{tpu_custom_call.1} parent=1 // pred_fallthru
      _
    // Predicated region
    $region6: #{tpu_custom_call.1} parent=1 // pred_check
      _
    $region7: #{tpu_custom_call.1} parent=1 // pred_check_branch
      %12 = sbr.rel (0) target = $region9
    $region8: #{tpu_custom_call.1} parent=1 // pred_region
      _
    $region9: #{tpu_custom_call.1} parent=1 // pred_fallthru
      _
    // Predicated region
    $region10: #{tpu_custom_call.1} parent=1 // pred_check
      _
    $region11: #{tpu_custom_call.1} parent=1 // pred_check_branch
      %14 = sbr.rel (0) target = $region13
    $region12: #{tpu_custom_call.1} parent=1 // pred_region
      _
    $region13: #{tpu_custom_call.1} parent=1 // pred_fallthru
      _
    %p15 = scmp.eq.s32.totalorder 0, 0
    // Predicated region
    $region14: #{tpu_custom_call.1} parent=1 // pred_check
      %p16 = pneg %p15
    $region15: #{tpu_custom_call.1} parent=1 // pred_check_branch
      %18 = sbr.rel (%p16) target = $region17
    $region16: #{tpu_custom_call.1} parent=1 // pred_region
      %v19 = vld [vmem:[%s0] sm:$0xff]
      %v20 = vld [vmem:[%s0 + $0x8] sm:$0xff]
      %v21 = vld [vmem:[%s1] sm:$0xff]
      %v22 = vld [vmem:[%s1 + $0x8] sm:$0xff]
      %v23 = vld [vmem:[%s1 + $0x10] sm:$0xff]
      %v24 = vld [vmem:[%s1 + $0x18] sm:$0xff]
      %vm25 = vcmask 261120
      %v27 = vsel %vm25, %v19, 0
      %v30 = vsel %vm25, %v20, 0
      %32 = vmatpush.msra.mxu0 0.0
      %33 = vmatpush.msra.mxu0 0.0
      %34 = vmatpush.msra.mxu0 0.0
      %35 = vmatpush.msra.mxu0 0.0
      %36 = vmatpush.msra.mxu0 0.0
      %37 = vmatpush.msra.mxu0 0.0
      %38 = vmatpush.msra.mxu0 0.0
      %39 = vmatpush.msra.mxu0 0.0
      %40 = vmatpush.msra.mxu0 0.0
      %41 = vmatpush.msra.mxu0 0.0
      %42 = vmatpush.msra.mxu0 0.0
      %43 = vmatpush.msra.mxu0 0.0
      %44 = vmatpush.msra.mxu0 %v24
      %45 = vmatpush.msra.mxu0 %v23
      %46 = vmatpush.msra.mxu0 %v22
      %47 = vmatpush.msra.mxu0 %v21
      %48 = vmatmul.f32.gmra.mxu0 %v27
      %v49 = vpop.f32.mrf.mxu0
      %v50 = vadd.f32 0.0, %v49
      %51 = vmatmul.f32.gmra.mxu0 %v30
      %v52 = vpop.f32.mrf.mxu0
      %v53 = vadd.f32 0.0, %v52
      %54 = vdwg.mxu0
      %vm55 = vcmask 130048
      %56 = vst.msk [vmem:[#allocation2] sm:$0xff] %vm55, %v50
      %57 = vst.msk [vmem:[#allocation2 + $0x8] sm:$0xff] %vm55, %v53
    $region17: #{tpu_custom_call.1} parent=1 // pred_fallthru
      _
    %v58 = vld [vmem:[#allocation2] sm:$0xff]
    %v59 = vld [vmem:[#allocation2 + $0x8] sm:$0xff]
    %v60 = vld [vmem:[%s2] sm:$0xff]
    %v61 = vld [vmem:[%s2 + $0x8] sm:$0xff]
    %vm62 = vcmask 130048
    %v64 = vsel %vm62, %v58, 0
    %v67 = vsel %vm62, %v59, 0
    %69 = vmatpush.msra.mxu0 0.0
    %70 = vmatpush.msra.mxu0 0.0
    %71 = vmatpush.msra.mxu0 0.0
    %72 = vmatpush.msra.mxu0 0.0
    %73 = vmatpush.msra.mxu0 0.0
    %74 = vmatpush.msra.mxu0 0.0
    %75 = vmatpush.msra.mxu0 0.0
    %76 = vmatpush.msra.mxu0 0.0
    %77 = vmatpush.msra.mxu0 0.0
    %78 = vmatpush.msra.mxu0 0.0
    %79 = vmatpush.msra.mxu0 0.0
    %80 = vmatpush.msra.mxu0 0.0
    %81 = vmatpush.msra.mxu0 0.0
    %82 = vmatpush.msra.mxu0 0.0
    %83 = vmatpush.msra.mxu0 %v61
    %84 = vmatpush.msra.mxu0 %v60
    %85 = vmatmul.f32.gmra.mxu0 %v64
    %v86 = vpop.f32.mrf.mxu0
    %v87 = vadd.f32 0.0, %v86
    %88 = vmatmul.f32.gmra.mxu0 %v67
    %v89 = vpop.f32.mrf.mxu0
    %v90 = vadd.f32 0.0, %v89
    %91 = vdwg.mxu0
    %vm92 = vcmask 261120
    %93 = vst.msk [vmem:[#allocation3] sm:$0xff] %vm92, %v87
    %94 = vst.msk [vmem:[#allocation3 + $0x8] sm:$0xff] %vm92, %v90
    // Predicated region
    $region18: #{tpu_custom_call.1} parent=1 // pred_check
      _
    $region19: #{tpu_custom_call.1} parent=1 // pred_check_branch
      %96 = sbr.rel (0) target = $region21
    $region20: #{tpu_custom_call.1} parent=1 // pred_region
      %98 = vsyncadd [#allocation4], 0
      %s99 = sshll.u32 [#allocation3], 4
      %s100 = int_to_ptr.vmem [resolvable:$true] %s99
      %s101 = sshll.u32 %s3, 4
      %s102 = int_to_ptr.hbm [resolvable:$true] %s101
      %107 = dma.vmem_to_hbm [thread:$0]  %s100, 256, %s102, [#allocation4], 128, 128, 8
    $region21: #{tpu_custom_call.1} parent=1 // pred_fallthru
      _
    // Predicated region
    $region22: #{tpu_custom_call.1} parent=1 // pred_check
      _
    $region23: #{tpu_custom_call.1} parent=1 // pred_check_branch
      %109 = sbr.rel (0) target = $region25
    $region24: #{tpu_custom_call.1} parent=1 // pred_region
      %111 = dma.done [#allocation4], 256
    $region25: #{tpu_custom_call.1} parent=1 // pred_fallthru
      _
    %112 = vsyncpa [#allocation4], 1

</llo_original>
